<compile_context>
chip_gen: v7x
topology: tpu7x:2x2x1
jax: 0.10.0
libtpu: 0.0.40
codegen_flags: <defaults>
</compile_context>

<pallas_src>
import functools

import numpy as np
import jax
import jax.numpy as jnp
from jax import lax
from jax.experimental import pallas as pl
from jax.experimental.pallas import tpu as pltpu


def _leaky_relu(v, slope=0.01):
    return jnp.where(v >= 0, v, slope * v)


def _round_up(x, m):
    return ((x + m - 1) // m) * m


def _pad2(a, rows, cols):
    r, c = a.shape
    return jnp.pad(a, ((0, rows - r), (0, cols - c)))


def _pick_tile(n_pad, req, unit):
    """Largest multiple of `unit` that divides n_pad and is <= req (>= unit)."""
    req = max(unit, (req // unit) * unit)
    best = unit
    t = unit
    lim = min(req, n_pad)
    while t <= lim:
        if n_pad % t == 0:
            best = t
        t += unit
    return best


def _chip_budgets():
    """Per-chip VMEM budgets: (vmem_limit_bytes, resident_Z_budget, big_vmem)."""
    cap = 64 * 1024 * 1024  # conservative fallback (v7x-sized)
    try:
        info = pltpu.get_tpu_info()
        cap = int(getattr(info, "vmem_capacity_bytes", cap))
    except Exception:
        pass
    big = cap >= 96 * 1024 * 1024               # v5e / v6e (128 MiB)
    vmem_limit = min((cap * 3) // 4, 100 * 1024 * 1024)  # ~48 MiB v7x, ~96 MiB v5e/v6e
    z_budget = (32 if big else 16) * 1024 * 1024
    return vmem_limit, z_budget, big


def _resident_spec(block_shape, index_map):
    """BlockSpec for an operand whose block index never changes: single-buffer."""
    try:
        return pl.BlockSpec(block_shape, index_map, pipeline_mode=pl.Buffered(1))
    except Exception:  # pipeline_mode / Buffered unavailable -> default buffering
        return pl.BlockSpec(block_shape, index_map)


# ---------------------------------------------------------------------------
# Kernel 1: row-tiled MLP preprocess (Linear -> LeakyReLU) x2
# ---------------------------------------------------------------------------
def _mlp_kernel(x_ref, w1_ref, b1_ref, w2_ref, b2_ref, z_ref):
    h = jnp.dot(x_ref[...], w1_ref[...], preferred_element_type=jnp.float32)
    h = _leaky_relu(h + b1_ref[...])
    h = jnp.dot(h.astype(w2_ref.dtype), w2_ref[...],
                preferred_element_type=jnp.float32)
    h = _leaky_relu(h + b2_ref[...])
    z_ref[...] = h.astype(z_ref.dtype)


def _mlp_call(x_p, w1_p, b1_p, w2_p, b2_p, tm, n_pad, out_dtype, vmem_limit):
    dp, h1p = w1_p.shape
    h2p = w2_p.shape[1]
    return pl.pallas_call(
        _mlp_kernel,
        out_shape=jax.ShapeDtypeStruct((n_pad, h2p), out_dtype),
        grid=(n_pad // tm,),
        in_specs=[
            pl.BlockSpec((tm, dp), lambda i: (i, 0)),          # x rows (streamed)
            _resident_spec((dp, h1p), lambda i: (0, 0)),        # W1
            _resident_spec((1, h1p), lambda i: (0, 0)),         # b1 (f32)
            _resident_spec((h1p, h2p), lambda i: (0, 0)),       # W2
            _resident_spec((1, h2p), lambda i: (0, 0)),         # b2 (f32)
        ],
        out_specs=pl.BlockSpec((tm, h2p), lambda i: (i, 0)),
        compiler_params=pltpu.CompilerParams(
            dimension_semantics=("parallel",),
            vmem_limit_bytes=vmem_limit),
    )(x_p, w1_p, b1_p, w2_p, b2_p)


# ---------------------------------------------------------------------------
# Kernel 2: tiled GCN propagation + 'moving' update + L2 row-normalize
#   emb = normalize( tau*prev + (1-tau) * LReLU( (A_hat @ Z) @ W + b ) )
# ---------------------------------------------------------------------------
def _prop_kernel(tau_ref, a_ref, z_ref, w_ref, b_ref, prev_ref,
                 emb_ref, embc_ref, acc_ref, *, tk, resident_z):
    k = pl.program_id(1)

    @pl.when(k == 0)
    def _():
        acc_ref[...] = jnp.zeros_like(acc_ref)

    if resident_z:
        off = pl.multiple_of(k * tk, 128)
        z_tile = z_ref[pl.ds(off, tk), :]     # Z resident in VMEM, sliced per k
    else:
        z_tile = z_ref[...]                   # Z streamed per (i, k) tile

    acc_ref[...] += jnp.dot(a_ref[...], z_tile,
                            preferred_element_type=jnp.float32)

    @pl.when(k == pl.num_programs(1) - 1)
    def _():
        tau = tau_ref[0]
        h = jnp.dot(acc_ref[...], w_ref[...],
                    preferred_element_type=jnp.float32)
        h = _leaky_relu(h + b_ref[...])
        h = tau * prev_ref[...] + (1.0 - tau) * h
        ssum = jnp.sum(h * h, axis=1, keepdims=True)
        # rsqrt -> EUP slot; tiny eps guards all-zero (padded) rows only.
        h = h * lax.rsqrt(jnp.maximum(ssum, 1e-12))
        emb_ref[...] = h
        embc_ref[...] = h.astype(embc_ref.dtype)


def _propagate(a_p, z_p, w_p, b_p, prev_p, tau_arr, *, tm, tk, n_pad,
               compute_dtype, resident_z, vmem_limit):
    cin_p = z_p.shape[1]
    cout_p = w_p.shape[1]
    grid = (n_pad // tm, n_pad // tk)

    if resident_z:
        z_spec = _resident_spec((n_pad, cin_p), lambda i, k: (0, 0))
    else:
        z_spec = pl.BlockSpec((tk, cin_p), lambda i, k: (k, 0))

    kernel = functools.partial(_prop_kernel, tk=tk, resident_z=resident_z)

    return pl.pallas_call(
        kernel,
        out_shape=(jax.ShapeDtypeStruct((n_pad, cout_p), jnp.float32),
                   jax.ShapeDtypeStruct((n_pad, cout_p), compute_dtype)),
        grid=grid,
        in_specs=[
            pl.BlockSpec(memory_space=pltpu.MemorySpace.SMEM),      # tau (1,)
            pl.BlockSpec((tm, tk), lambda i, k: (i, k)),            # A_hat tile
            z_spec,                                                 # Z
            _resident_spec((cin_p, cout_p), lambda i, k: (0, 0)),   # Wc (f32)
            _resident_spec((1, cout_p), lambda i, k: (0, 0)),       # bc (f32)
            pl.BlockSpec((tm, cout_p), lambda i, k: (i, 0)),        # prev rows
        ],
        out_specs=(pl.BlockSpec((tm, cout_p), lambda i, k: (i, 0)),
                   pl.BlockSpec((tm, cout_p), lambda i, k: (i, 0))),
        scratch_shapes=[pltpu.VMEM((tm, cin_p), jnp.float32)],
        compiler_params=pltpu.CompilerParams(
            dimension_semantics=("parallel", "arbitrary"),
            vmem_limit_bytes=vmem_limit),
    )(tau_arr, a_p, z_p, w_p, b_p, prev_p)


# ---------------------------------------------------------------------------
# Wrapper: padding, dtype casting, tiling decisions, kernel composition
# ---------------------------------------------------------------------------
def roland_forward(x, a_hat, params, prev0, prev1, tau, *,
                   compute_dtype=jnp.bfloat16, tm=None, tk=None,
                   force_stream_z=False):
    n, d_in = x.shape
    h1 = params["w1"].shape[1]
    h2 = params["w2"].shape[1]
    c1 = params["wc1"].shape[1]
    c2 = params["wc2"].shape[1]

    vmem_limit, z_budget, big_vmem = _chip_budgets()

    # lane-dense feature dims (multiples of 128)
    dp = _round_up(d_in, 128)
    h1p = _round_up(h1, 128)
    h2p = _round_up(h2, 128)
    c1p = _round_up(c1, 128)
    c2p = _round_up(c2, 128)

    # Node axis: pad only to 128 (A_hat traffic scales with n_pad^2), then pick
    # tm/tk as divisors of n_pad.
    n_pad = _round_up(n, 128)
    tm_req = tm if tm is not None else 512
    tk_req = tk if tk is not None else (2048 if big_vmem else 1024)
    tm_cap = min(tm_req, n_pad)
    if n_pad >= 256:
        tm_cap = min(tm_cap, n_pad // 2)   # >= 2 row tiles -> both v7x TCs busy
    tm_ = _pick_tile(n_pad, tm_cap, 128)
    tk_ = _pick_tile(n_pad, min(tk_req, n_pad), 128)

    # Resident-Z decision per propagate stage (single-buffered copy in VMEM).
    itemsize = jnp.dtype(compute_dtype).itemsize
    res_z1 = (not force_stream_z) and (n_pad * h2p * itemsize <= z_budget)
    res_z2 = (not force_stream_z) and (n_pad * c1p * itemsize <= z_budget)

    f32 = jnp.float32
    x_p = _pad2(x.astype(f32), n_pad, dp).astype(compute_dtype)
    a_p = _pad2(a_hat.astype(f32), n_pad, n_pad).astype(compute_dtype)
    w1_p = _pad2(params["w1"].astype(f32), dp, h1p).astype(compute_dtype)
    b1_p = _pad2(params["b1"].astype(f32), 1, h1p)
    w2_p = _pad2(params["w2"].astype(f32), h1p, h2p).astype(compute_dtype)
    b2_p = _pad2(params["b2"].astype(f32), 1, h2p)
    wc1_p = _pad2(params["wc1"].astype(f32), h2p, c1p)
    bc1_p = _pad2(params["bc1"].astype(f32), 1, c1p)
    wc2_p = _pad2(params["wc2"].astype(f32), c1p, c2p)
    bc2_p = _pad2(params["bc2"].astype(f32), 1, c2p)
    prev0_p = _pad2(prev0.astype(f32), n_pad, c1p)
    prev1_p = _pad2(prev1.astype(f32), n_pad, c2p)
    tau_arr = jnp.asarray(tau, f32).reshape(1)

    # 1) MLP preprocess (row-parallel), compute-dtype matmuls, f32 accumulate.
    z1 = _mlp_call(x_p, w1_p, b1_p, w2_p, b2_p, tm_, n_pad,
                   compute_dtype, vmem_limit)

    # 2) GCNConv1 + moving update + L2 normalize -> emb0 (f32 + compute dtype).
    emb0_f32, emb0_c = _propagate(
        a_p, z1, wc1_p, bc1_p, prev0_p, tau_arr,
        tm=tm_, tk=tk_, n_pad=n_pad, compute_dtype=compute_dtype,
        resident_z=res_z1, vmem_limit=vmem_limit)

    # 3) GCNConv2 consumes emb0 in compute dtype directly (no extra cast pass).
    emb1_f32, _ = _propagate(
        a_p, emb0_c, wc2_p, bc2_p, prev1_p, tau_arr,
        tm=tm_, tk=tk_, n_pad=n_pad, compute_dtype=compute_dtype,
        resident_z=res_z2, vmem_limit=vmem_limit)

    emb0 = emb0_f32[:n, :c1]
    emb1 = emb1_f32[:n, :c2]
    # The module's returned h IS emb1 -> aliased, no duplicate kernel store.
    return emb1, emb0, emb1


# ---------------------------------------------------------------------------
# Host-side helpers (outside the kernels)
# ---------------------------------------------------------------------------
def build_ahat(edge_index, n):
    """Dense GCN-normalized adjacency: D^-1/2 (A + I) D^-1/2 (self-loops not
    double-counted, matching add_remaining_self_loops semantics)."""
    src, dst = edge_index
    a = jnp.zeros((n, n), jnp.float32).at[dst, src].add(1.0)
    a = jnp.minimum(a, 1.0)                     # dedupe repeated edges
    idx = jnp.arange(n)
    a = a.at[idx, idx].set(1.0)                 # ensure (not add) self loops
    deg = jnp.sum(a, axis=1)
    dinv = lax.rsqrt(deg)
    return a * dinv[:, None] * dinv[None, :]


def reference_forward(x, a_hat, p, prev0, prev1, tau):
    """Pure-JAX reference matching the PyTorch forward."""
    h = _leaky_relu(x @ p["w1"] + p["b1"])
    h = _leaky_relu(h @ p["w2"] + p["b2"])
    h = _leaky_relu(a_hat @ (h @ p["wc1"]) + p["bc1"])
    h = tau * prev0 + (1.0 - tau) * h
    h = h / jnp.linalg.norm(h, axis=1, keepdims=True)
    emb0 = h
    h = _leaky_relu(a_hat @ (h @ p["wc2"]) + p["bc2"])
    h = tau * prev1 + (1.0 - tau) * h
    h = h / jnp.linalg.norm(h, axis=1, keepdims=True)
    return h, emb0, h


def _make_case(key, n, d_in, h1, h2, c1, c2, num_edges):
    ks = jax.random.split(key, 16)

    def glorot(k, shape):
        fan_in, fan_out = shape
        lim = jnp.sqrt(6.0 / (fan_in + fan_out))
        return jax.random.uniform(k, shape, jnp.float32, -lim, lim)

    params = {
        "w1": glorot(ks[0], (d_in, h1)),
        "b1": jax.random.normal(ks[1], (1, h1), jnp.float32) * 0.01,
        "w2": glorot(ks[2], (h1, h2)),
        "b2": jax.random.normal(ks[3], (1, h2), jnp.float32) * 0.01,
        "wc1": glorot(ks[4], (h2, c1)),
        "bc1": jax.random.normal(ks[5], (1, c1), jnp.float32) * 0.01,
        "wc2": glorot(ks[6], (c1, c2)),
        "bc2": jax.random.normal(ks[7], (1, c2), jnp.float32) * 0.01,
    }
    x = jax.random.normal(ks[8], (n, d_in), jnp.float32)
    prev0 = jax.random.normal(ks[9], (n, c1), jnp.float32)
    prev1 = jax.random.normal(ks[10], (n, c2), jnp.float32)

    src = jax.random.randint(ks[11], (num_edges,), 0, n)
    dst = jax.random.randint(ks[12], (num_edges,), 0, n)
    edge_index = jnp.stack([jnp.concatenate([src, dst]),
                            jnp.concatenate([dst, src])], axis=0)
    a_hat = build_ahat(edge_index, n)
    return x, a_hat, params, prev0, prev1


def _check(kern_out, ref_out, rtol, atol):
    for k, r in zip(kern_out, ref_out):
        np.testing.assert_allclose(np.asarray(k), np.asarray(r),
                                   rtol=rtol, atol=atol)


if __name__ == "__main__":
    root = jax.random.PRNGKey(0)
    k_a, k_b = jax.random.split(root)

    # ---- Case 1: small graph, f32 compute path (tight tolerance) ----------
    N, D_IN, H1, H2, C1, C2 = 64, 32, 64, 64, 64, 32
    x, a_hat, params, prev0, prev1 = _make_case(k_a, N, D_IN, H1, H2, C1, C2, 256)
    tau = 0.0  # 'moving' update, tau initialized to 0
    out = roland_forward(x, a_hat, params, prev0, prev1, tau,
                         compute_dtype=jnp.float32)
    jax.block_until_ready(out)
    ref = reference_forward(x, a_hat, params, prev0, prev1, tau)
    _check(out, ref, rtol=1e-4, atol=1e-4)

    # ---- Case 2: same graph, bf16 fast path (loose tolerance) -------------
    tau = 0.35
    out = roland_forward(x, a_hat, params, prev0, prev1, tau,
                         compute_dtype=jnp.bfloat16)
    jax.block_until_ready(out)
    ref = reference_forward(x, a_hat, params, prev0, prev1, tau)
    _check(out, ref, rtol=5e-2, atol=4e-2)

    # ---- Case 3: odd dims, multi-tile grid + resident-Z dynamic slicing ---
    N, D_IN, H1, H2, C1, C2 = 192, 48, 80, 96, 72, 40
    x, a_hat, params, prev0, prev1 = _make_case(k_b, N, D_IN, H1, H2, C1, C2, 600)
    tau = 0.6
    out = roland_forward(x, a_hat, params, prev0, prev1, tau,
                         compute_dtype=jnp.float32, tm=128, tk=128)
    jax.block_until_ready(out)
    ref = reference_forward(x, a_hat, params, prev0, prev1, tau)
    _check(out, ref, rtol=1e-4, atol=1e-4)

    # ---- Case 4: same graph, bf16, streamed-Z fallback path ---------------
    out = roland_forward(x, a_hat, params, prev0, prev1, tau,
                         compute_dtype=jnp.bfloat16, tm=128, tk=128,
                         force_stream_z=True)
    jax.block_until_ready(out)
    _check(out, ref, rtol=5e-2, atol=4e-2)

    print("KERNEL_OK")
</pallas_src>

<mosaic_0001>
module attributes {stable_mosaic.version = 11 : i64} {
  func.func @_mlp_kernel(%arg0: i32, %arg1: memref<128x128xf32, #tpu.memory_space<vmem>>, %arg2: memref<128x128xf32, #tpu.memory_space<vmem>>, %arg3: memref<1x128xf32, #tpu.memory_space<vmem>>, %arg4: memref<128x128xf32, #tpu.memory_space<vmem>>, %arg5: memref<1x128xf32, #tpu.memory_space<vmem>>, %arg6: memref<128x128xf32, #tpu.memory_space<vmem>>) attributes {dimension_semantics = [#tpu.dimension_semantics<parallel>], iteration_bounds = array<i64: 1>, scalar_prefetch = 0 : i64, scratch_operands = 0 : i64, tpu.core_type = #tpu.core_type<tc>, window_params = [{transform_indices = @transform_0, window_bounds = array<i64: 128, 128>}, {pipeline_mode = #tpu.pipeline_mode<synchronous>, transform_indices = @transform_1, window_bounds = array<i64: 128, 128>}, {pipeline_mode = #tpu.pipeline_mode<synchronous>, transform_indices = @transform_2, window_bounds = array<i64: 1, 128>}, {pipeline_mode = #tpu.pipeline_mode<synchronous>, transform_indices = @transform_3, window_bounds = array<i64: 128, 128>}, {pipeline_mode = #tpu.pipeline_mode<synchronous>, transform_indices = @transform_4, window_bounds = array<i64: 1, 128>}, {transform_indices = @transform_5, window_bounds = array<i64: 128, 128>}]} {
    %c0 = arith.constant 0 : index
    %c0_0 = arith.constant 0 : index
    %0 = vector.load %arg1[%c0, %c0_0] : memref<128x128xf32, #tpu.memory_space<vmem>>, vector<128x128xf32>
    %c0_1 = arith.constant 0 : index
    %c0_2 = arith.constant 0 : index
    %1 = vector.load %arg2[%c0_1, %c0_2] : memref<128x128xf32, #tpu.memory_space<vmem>>, vector<128x128xf32>
    %cst = arith.constant dense<0.000000e+00> : vector<128x128xf32>
    %2 = tpu.matmul %0, %1, %cst {dimension_numbers = #tpu.dot_dimension_numbers<[1], [0], [0], [1], [0, 0, 1, 1], [], []>} : vector<128x128xf32>, vector<128x128xf32>, vector<128x128xf32> -> vector<128x128xf32>
    %c0_3 = arith.constant 0 : index
    %c0_4 = arith.constant 0 : index
    %3 = vector.load %arg3[%c0_3, %c0_4] : memref<1x128xf32, #tpu.memory_space<vmem>>, vector<1x128xf32>
    %4 = vector.broadcast %3 : vector<1x128xf32> to vector<128x128xf32>
    %5 = arith.addf %2, %4 : vector<128x128xf32>
    %cst_5 = arith.constant 0.000000e+00 : f32
    %6 = vector.broadcast %cst_5 : f32 to vector<128x128xf32>
    %7 = arith.cmpf oge, %5, %6 : vector<128x128xf32>
    %cst_6 = arith.constant 0.00999999977 : f32
    %8 = vector.broadcast %cst_6 : f32 to vector<128x128xf32>
    %9 = arith.mulf %8, %5 : vector<128x128xf32>
    %10 = arith.select %7, %5, %9 : vector<128x128xi1>, vector<128x128xf32>
    %c0_7 = arith.constant 0 : index
    %c0_8 = arith.constant 0 : index
    %11 = vector.load %arg4[%c0_7, %c0_8] : memref<128x128xf32, #tpu.memory_space<vmem>>, vector<128x128xf32>
    %cst_9 = arith.constant dense<0.000000e+00> : vector<128x128xf32>
    %12 = tpu.matmul %10, %11, %cst_9 {dimension_numbers = #tpu.dot_dimension_numbers<[1], [0], [0], [1], [0, 0, 1, 1], [], []>} : vector<128x128xf32>, vector<128x128xf32>, vector<128x128xf32> -> vector<128x128xf32>
    %c0_10 = arith.constant 0 : index
    %c0_11 = arith.constant 0 : index
    %13 = vector.load %arg5[%c0_10, %c0_11] : memref<1x128xf32, #tpu.memory_space<vmem>>, vector<1x128xf32>
    %14 = vector.broadcast %13 : vector<1x128xf32> to vector<128x128xf32>
    %15 = arith.addf %12, %14 : vector<128x128xf32>
    %cst_12 = arith.constant 0.000000e+00 : f32
    %16 = vector.broadcast %cst_12 : f32 to vector<128x128xf32>
    %17 = arith.cmpf oge, %15, %16 : vector<128x128xf32>
    %cst_13 = arith.constant 0.00999999977 : f32
    %18 = vector.broadcast %cst_13 : f32 to vector<128x128xf32>
    %19 = arith.mulf %18, %15 : vector<128x128xf32>
    %20 = arith.select %17, %15, %19 : vector<128x128xi1>, vector<128x128xf32>
    %c0_14 = arith.constant 0 : index
    %c0_15 = arith.constant 0 : index
    %21 = vector.load %arg6[%c0_14, %c0_15] : memref<128x128xf32, #tpu.memory_space<vmem>>, vector<128x128xf32>
    tpu.vector_store %arg6[%c0_14, %c0_15], %20 {strides = array<i32>} : memref<128x128xf32, #tpu.memory_space<vmem>>, vector<128x128xf32>,
    return
  }
  func.func @transform_0(%arg0: i32) -> (i32, i32) {
    %c0_i32 = arith.constant 0 : i32
    %c0_i32_0 = arith.constant 0 : i32
    return %arg0, %c0_i32 : i32, i32
  }
  func.func @transform_1(%arg0: i32) -> (i32, i32) {
    %c0_i32 = arith.constant 0 : i32
    %c0_i32_0 = arith.constant 0 : i32
    %c0_i32_1 = arith.constant 0 : i32
    return %c0_i32, %c0_i32_0 : i32, i32
  }
  func.func @transform_2(%arg0: i32) -> (i32, i32) {
    %c0_i32 = arith.constant 0 : i32
    %c0_i32_0 = arith.constant 0 : i32
    %c0_i32_1 = arith.constant 0 : i32
    return %c0_i32, %c0_i32_0 : i32, i32
  }
  func.func @transform_3(%arg0: i32) -> (i32, i32) {
    %c0_i32 = arith.constant 0 : i32
    %c0_i32_0 = arith.constant 0 : i32
    %c0_i32_1 = arith.constant 0 : i32
    return %c0_i32, %c0_i32_0 : i32, i32
  }
  func.func @transform_4(%arg0: i32) -> (i32, i32) {
    %c0_i32 = arith.constant 0 : i32
    %c0_i32_0 = arith.constant 0 : i32
    %c0_i32_1 = arith.constant 0 : i32
    return %c0_i32, %c0_i32_0 : i32, i32
  }
  func.func @transform_5(%arg0: i32) -> (i32, i32) {
    %c0_i32 = arith.constant 0 : i32
    %c0_i32_0 = arith.constant 0 : i32
    return %arg0, %c0_i32 : i32, i32
  }
}

</mosaic_0001>

<llo_original>
// kernel: tpu_custom_call.1
$region0: #{tpu_custom_call.1}
  #allocation0 [shape = 'u32[]', space=smem, size = 0x4, offset = 0x4, fixed_abs, tag = 'smem constant byte address 0x4 - core index']
  #allocation1 [shape = 'u32[144,128]{1,0:T(1,128)}', space=vmem, size = 0x12000, scoped, tag = 'internal scratch']
  %s0 = inlined_call_operand.hbm [shape: f32[128,128], index: 0, kind: input, shape index: {}]
  %s1 = inlined_call_operand.hbm [shape: f32[128,128], index: 1, kind: input, shape index: {}]
  %s2 = inlined_call_operand.vmem [shape: f32[1,128], index: 2, kind: input, shape index: {}]
  %s3 = inlined_call_operand.hbm [shape: f32[128,128], index: 3, kind: input, shape index: {}]
  %s4 = inlined_call_operand.vmem [shape: f32[1,128], index: 4, kind: input, shape index: {}]
  %s5 = inlined_call_operand.hbm [shape: f32[128,128], index: 5, kind: output, shape index: {}]
  %s6 = sld [smem:[#allocation0]]
  $region42: #{tpu_custom_call.1} parent=0
    _
  %s8 = ssub.s32 1, %s6
  %s9 = scalar_select 0, %s8, %s6
  $region1: #{tpu_custom_call.1} parent=0
    #allocation2 [shape = 'u8[65536]{0}', space=vmem, size = 0x10000, scoped, tag = 'input window, operand 0, single buffered']
    #allocation3 [shape = 's32[1]{0}', space=sflag, size = 0x4, scoped, tag = 'scoped memory for tpu_custom_call.1']
    #allocation4 [shape = 's32[1]{0}', space=sflag, size = 0x4, scoped, tag = 'scoped memory for tpu_custom_call.1']
    #allocation5 [shape = 'u8[65536]{0}', space=vmem, size = 0x10000, scoped, tag = 'input window, operand 1, single buffered']
    #allocation6 [shape = 's32[1]{0}', space=sflag, size = 0x4, scoped, tag = 'scoped memory for tpu_custom_call.1']
    #allocation7 [shape = 'u8[65536]{0}', space=vmem, size = 0x10000, scoped, tag = 'input window, operand 3, single buffered']
    #allocation8 [shape = 'u8[65536]{0}', space=vmem, size = 0x10000, scoped, tag = 'output window, operand 0, single buffered']
    %10 = vsyncpa [#allocation3], 0
    %11 = vsyncpa [#allocation6], 0
    %12 = vsyncpa [#allocation4], 0
    // Predicated region
    $region2: #{tpu_custom_call.1} parent=1 // pred_check
      _
    $region3: #{tpu_custom_call.1} parent=1 // pred_check_branch
      %14 = sbr.rel (0) target = $region5
    $region4: #{tpu_custom_call.1} parent=1 // pred_region
      %s16 = ssub.s32 2048, 2048
      %17 = vsyncadd [#allocation3], %s16
      %s18 = sshll.u32 [#allocation2], 4
      %s19 = int_to_ptr.vmem [resolvable:$true] %s18
      %24 = dma.hbm_to_vmem [thread:$0]  %s0, 2048, %s19, [#allocation3], 128, 128, 8
    $region5: #{tpu_custom_call.1} parent=1 // pred_fallthru
      _
    // Predicated region
    $region6: #{tpu_custom_call.1} parent=1 // pred_check
      _
    $region7: #{tpu_custom_call.1} parent=1 // pred_check_branch
      %26 = sbr.rel (0) target = $region9
    $region8: #{tpu_custom_call.1} parent=1 // pred_region
      %s28 = ssub.s32 2048, 2048
      %29 = vsyncadd [#allocation6], %s28
      %s30 = sshll.u32 [#allocation5], 4
      %s31 = int_to_ptr.vmem [resolvable:$true] %s30
      %36 = dma.hbm_to_vmem [thread:$0]  %s1, 2048, %s31, [#allocation6], 128, 128, 8
    $region9: #{tpu_custom_call.1} parent=1 // pred_fallthru
      _
    // Predicated region
    $region10: #{tpu_custom_call.1} parent=1 // pred_check
      _
    $region11: #{tpu_custom_call.1} parent=1 // pred_check_branch
      %38 = sbr.rel (0) target = $region13
    $region12: #{tpu_custom_call.1} parent=1 // pred_region
      _
    $region13: #{tpu_custom_call.1} parent=1 // pred_fallthru
      _
    // Predicated region
    $region14: #{tpu_custom_call.1} parent=1 // pred_check
      _
    $region15: #{tpu_custom_call.1} parent=1 // pred_check_branch
      %40 = sbr.rel (0) target = $region17
    $region16: #{tpu_custom_call.1} parent=1 // pred_region
      %s42 = ssub.s32 2048, 2048
      %43 = vsyncadd [#allocation6], %s42
      %s44 = sshll.u32 [#allocation7], 4
      %s45 = int_to_ptr.vmem [resolvable:$true] %s44
      %50 = dma.hbm_to_vmem [thread:$0]  %s3, 2048, %s45, [#allocation6], 128, 128, 8
    $region17: #{tpu_custom_call.1} parent=1 // pred_fallthru
      _
    // Predicated region
    $region18: #{tpu_custom_call.1} parent=1 // pred_check
      _
    $region19: #{tpu_custom_call.1} parent=1 // pred_check_branch
      %52 = sbr.rel (0) target = $region21
    $region20: #{tpu_custom_call.1} parent=1 // pred_region
      _
    $region21: #{tpu_custom_call.1} parent=1 // pred_fallthru
      _
    // Predicated region
    $region22: #{tpu_custom_call.1} parent=1 // pred_check
      _
    $region23: #{tpu_custom_call.1} parent=1 // pred_check_branch
      %54 = sbr.rel (0) target = $region25
    $region24: #{tpu_custom_call.1} parent=1 // pred_region
      %55 = dma.done [#allocation3], 2048
    $region25: #{tpu_custom_call.1} parent=1 // pred_fallthru
      _
    // Predicated region
    $region26: #{tpu_custom_call.1} parent=1 // pred_check
      _
    $region27: #{tpu_custom_call.1} parent=1 // pred_check_branch
      %57 = sbr.rel (0) target = $region29
    $region28: #{tpu_custom_call.1} parent=1 // pred_region
      %58 = dma.done [#allocation6], 2048
    $region29: #{tpu_custom_call.1} parent=1 // pred_fallthru
      _
    // Predicated region
    $region30: #{tpu_custom_call.1} parent=1 // pred_check
      _
    $region31: #{tpu_custom_call.1} parent=1 // pred_check_branch
      %60 = sbr.rel (0) target = $region33
    $region32: #{tpu_custom_call.1} parent=1 // pred_region
      %61 = dma.done [#allocation6], 2048
    $region33: #{tpu_custom_call.1} parent=1 // pred_fallthru
      _
    %v62 = vld [vmem:[#allocation2] sm:$0xff]
    %v63 = vld [vmem:[#allocation2 + $0x8] sm:$0xff]
    %v64 = vld [vmem:[#allocation2 + $0x10] sm:$0xff]
    %v65 = vld [vmem:[#allocation2 + $0x18] sm:$0xff]
    %v66 = vld [vmem:[#allocation2 + $0x20] sm:$0xff]
    %v67 = vld [vmem:[#allocation2 + $0x28] sm:$0xff]
    %v68 = vld [vmem:[#allocation2 + $0x30] sm:$0xff]
    %v69 = vld [vmem:[#allocation2 + $0x38] sm:$0xff]
    %v70 = vld [vmem:[#allocation2 + $0x40] sm:$0xff]
    %v71 = vld [vmem:[#allocation2 + $0x48] sm:$0xff]
    %v72 = vld [vmem:[#allocation2 + $0x50] sm:$0xff]
    %v73 = vld [vmem:[#allocation2 + $0x58] sm:$0xff]
    %v74 = vld [vmem:[#allocation2 + $0x60] sm:$0xff]
    %v75 = vld [vmem:[#allocation2 + $0x68] sm:$0xff]
    %v76 = vld [vmem:[#allocation2 + $0x70] sm:$0xff]
    %v77 = vld [vmem:[#allocation2 + $0x78] sm:$0xff]
    %v78 = vld [vmem:[#allocation5] sm:$0xff]
    %v79 = vld [vmem:[#allocation5 + $0x8] sm:$0xff]
    %v80 = vld [vmem:[#allocation5 + $0x10] sm:$0xff]
    %v81 = vld [vmem:[#allocation5 + $0x18] sm:$0xff]
    %v82 = vld [vmem:[#allocation5 + $0x20] sm:$0xff]
    %v83 = vld [vmem:[#allocation5 + $0x28] sm:$0xff]
    %v84 = vld [vmem:[#allocation5 + $0x30] sm:$0xff]
    %v85 = vld [vmem:[#allocation5 + $0x38] sm:$0xff]
    %v86 = vld [vmem:[#allocation5 + $0x40] sm:$0xff]
    %v87 = vld [vmem:[#allocation5 + $0x48] sm:$0xff]
    %v88 = vld [vmem:[#allocation5 + $0x50] sm:$0xff]
    %v89 = vld [vmem:[#allocation5 + $0x58] sm:$0xff]
    %v90 = vld [vmem:[#allocation5 + $0x60] sm:$0xff]
    %v91 = vld [vmem:[#allocation5 + $0x68] sm:$0xff]
    %v92 = vld [vmem:[#allocation5 + $0x70] sm:$0xff]
    %v93 = vld [vmem:[#allocation5 + $0x78] sm:$0xff]
    %v94 = vld [vmem:[%s2] sm:$0x1]
    %v96 = vlaneseq
    %v97 = vshrl.u32 %v96, 7
    %v98 = vsub.s32 0, %v97
    %v99 = vrot.slane %v94, %v98
    %101 = vmatprep.subr.mxu0 0.0
    %102 = vmatpush1.msra.mxu0 %v78
    %103 = vmatprep.subr.mxu0 0.0
    %104 = vmatpush1.msra.mxu0 %v79
    %105 = vmatprep.subr.mxu0 0.0
    %106 = vmatpush1.msra.mxu0 %v80
    %107 = vmatprep.subr.mxu0 0.0
    %108 = vmatpush1.msra.mxu0 %v81
    %109 = vmatprep.subr.mxu0 0.0
    %110 = vmatpush1.msra.mxu0 %v82
    %111 = vmatprep.subr.mxu0 0.0
    %112 = vmatpush1.msra.mxu0 %v83
    %113 = vmatprep.subr.mxu0 0.0
    %114 = vmatpush1.msra.mxu0 %v84
    %115 = vmatprep.subr.mxu0 0.0
    %116 = vmatpush1.msra.mxu0 %v85
    %117 = vmatprep.subr.mxu0 0.0
    %118 = vmatpush1.msra.mxu0 %v86
    %119 = vmatprep.subr.mxu0 0.0
    %120 = vmatpush1.msra.mxu0 %v87
    %121 = vmatprep.subr.mxu0 0.0
    %122 = vmatpush1.msra.mxu0 %v88
    %123 = vmatprep.subr.mxu0 0.0
    %124 = vmatpush1.msra.mxu0 %v89
    %125 = vmatprep.subr.mxu0 0.0
    %126 = vmatpush1.msra.mxu0 %v90
    %127 = vmatprep.subr.mxu0 0.0
    %128 = vmatpush1.msra.mxu0 %v91
    %129 = vmatprep.subr.mxu0 0.0
    %130 = vmatpush1.msra.mxu0 %v92
    %131 = vmatprep.subr.mxu0 0.0
    %132 = vmatpush1.msra.mxu0 %v93
    %133 = vmatprep.subr.mxu0 0.0
    %134 = vmatpush1.msra.mxu0 0.0
    %135 = vmatprep.subr.mxu0 0.0
    %136 = vmatpush1.msra.mxu0 0.0
    %137 = vmatprep.subr.mxu0 0.0
    %138 = vmatpush1.msra.mxu0 0.0
    %139 = vmatprep.subr.mxu0 0.0
    %140 = vmatpush1.msra.mxu0 0.0
    %141 = vmatprep.subr.mxu0 0.0
    %142 = vmatpush1.msra.mxu0 0.0
    %143 = vmatprep.subr.mxu0 0.0
    %144 = vmatpush1.msra.mxu0 0.0
    %145 = vmatprep.subr.mxu0 0.0
    %146 = vmatpush1.msra.mxu0 0.0
    %147 = vmatprep.subr.mxu0 0.0
    %148 = vmatpush1.msra.mxu0 0.0
    %149 = vmatprep.subr.mxu0 0.0
    %150 = vmatpush1.msra.mxu0 0.0
    %151 = vmatprep.subr.mxu0 0.0
    %152 = vmatpush1.msra.mxu0 0.0
    %153 = vmatprep.subr.mxu0 0.0
    %154 = vmatpush1.msra.mxu0 0.0
    %155 = vmatprep.subr.mxu0 0.0
    %156 = vmatpush1.msra.mxu0 0.0
    %157 = vmatprep.subr.mxu0 0.0
    %158 = vmatpush1.msra.mxu0 0.0
    %159 = vmatprep.subr.mxu0 0.0
    %160 = vmatpush1.msra.mxu0 0.0
    %161 = vmatprep.subr.mxu0 0.0
    %162 = vmatpush1.msra.mxu0 0.0
    %163 = vmatprep.subr.mxu0 0.0
    %164 = vmatpush1.msra.mxu0 0.0
    %165 = vmatprep.mubr.f32.mxu0 0.0
    %166 = vmatmul.mubr.f32.gmra.mrb[0].mxu0 %v62
    %v167 = vpop.f32.mrb[0].mxu0
    %v168 = vadd.f32 %v99, %v167
    %v169 = vpop.f32.mrb[0].mxu0
    %170 = vmatprep.mubr.f32.mxu0 0.0
    %171 = vmatmul.mubr.f32.gmra.mrb[0].mxu0 %v63
    %v172 = vpop.f32.mrb[0].mxu0
    %v173 = vadd.f32 %v99, %v172
    %v174 = vpop.f32.mrb[0].mxu0
    %175 = vmatprep.mubr.f32.mxu0 0.0
    %176 = vmatmul.mubr.f32.gmra.mrb[0].mxu0 %v64
    %v177 = vpop.f32.mrb[0].mxu0
    %v178 = vadd.f32 %v99, %v177
    %v179 = vpop.f32.mrb[0].mxu0
    %180 = vmatprep.mubr.f32.mxu0 0.0
    %181 = vmatmul.mubr.f32.gmra.mrb[0].mxu0 %v65
    %v182 = vpop.f32.mrb[0].mxu0
    %v183 = vadd.f32 %v99, %v182
    %v184 = vpop.f32.mrb[0].mxu0
    %185 = vmatprep.mubr.f32.mxu0 0.0
    %186 = vmatmul.mubr.f32.gmra.mrb[0].mxu0 %v66
    %v187 = vpop.f32.mrb[0].mxu0
    %v188 = vadd.f32 %v99, %v187
    %v189 = vpop.f32.mrb[0].mxu0
    %190 = vmatprep.mubr.f32.mxu0 0.0
    %191 = vmatmul.mubr.f32.gmra.mrb[0].mxu0 %v67
    %v192 = vpop.f32.mrb[0].mxu0
    %v193 = vadd.f32 %v99, %v192
    %v194 = vpop.f32.mrb[0].mxu0
    %195 = vmatprep.mubr.f32.mxu0 0.0
    %196 = vmatmul.mubr.f32.gmra.mrb[0].mxu0 %v68
    %v197 = vpop.f32.mrb[0].mxu0
    %v198 = vadd.f32 %v99, %v197
    %v199 = vpop.f32.mrb[0].mxu0
    %200 = vmatprep.mubr.f32.mxu0 0.0
    %201 = vmatmul.mubr.f32.gmra.mrb[0].mxu0 %v69
    %v202 = vpop.f32.mrb[0].mxu0
    %v203 = vadd.f32 %v99, %v202
    %v204 = vpop.f32.mrb[0].mxu0
    %205 = vmatprep.mubr.f32.mxu0 0.0
    %206 = vmatmul.mubr.f32.gmra.mrb[0].mxu0 %v70
    %v207 = vpop.f32.mrb[0].mxu0
    %v208 = vadd.f32 %v99, %v207
    %v209 = vpop.f32.mrb[0].mxu0
    %210 = vmatprep.mubr.f32.mxu0 0.0
    %211 = vmatmul.mubr.f32.gmra.mrb[0].mxu0 %v71
    %v212 = vpop.f32.mrb[0].mxu0
    %v213 = vadd.f32 %v99, %v212
    %v214 = vpop.f32.mrb[0].mxu0
    %215 = vmatprep.mubr.f32.mxu0 0.0
    %216 = vmatmul.mubr.f32.gmra.mrb[0].mxu0 %v72
    %v217 = vpop.f32.mrb[0].mxu0
    %v218 = vadd.f32 %v99, %v217
    %v219 = vpop.f32.mrb[0].mxu0
    %220 = vmatprep.mubr.f32.mxu0 0.0
    %221 = vmatmul.mubr.f32.gmra.mrb[0].mxu0 %v73
    %v222 = vpop.f32.mrb[0].mxu0
    %v223 = vadd.f32 %v99, %v222
    %v224 = vpop.f32.mrb[0].mxu0
    %225 = vmatprep.mubr.f32.mxu0 0.0
    %226 = vmatmul.mubr.f32.gmra.mrb[0].mxu0 %v74
    %v227 = vpop.f32.mrb[0].mxu0
    %v228 = vadd.f32 %v99, %v227
    %v229 = vpop.f32.mrb[0].mxu0
    %230 = vmatprep.mubr.f32.mxu0 0.0
    %231 = vmatmul.mubr.f32.gmra.mrb[0].mxu0 %v75
    %v232 = vpop.f32.mrb[0].mxu0
    %v233 = vadd.f32 %v99, %v232
    %v234 = vpop.f32.mrb[0].mxu0
    %235 = vmatprep.mubr.f32.mxu0 0.0
    %236 = vmatmul.mubr.f32.gmra.mrb[0].mxu0 %v76
    %v237 = vpop.f32.mrb[0].mxu0
    %v238 = vadd.f32 %v99, %v237
    %v239 = vpop.f32.mrb[0].mxu0
    %240 = vmatprep.mubr.f32.mxu0 0.0
    %241 = vmatmul.mubr.f32.gmra.mrb[0].mxu0 %v77
    %v242 = vpop.f32.mrb[0].mxu0
    %v243 = vadd.f32 %v99, %v242
    %v244 = vpop.f32.mrb[0].mxu0
    %245 = vdwg.mxu0
    %vm246 = vcmp.ge.f32.partialorder %v168, 0.0
    %vm247 = vcmp.ge.f32.partialorder %v173, 0.0
    %vm248 = vcmp.ge.f32.partialorder %v178, 0.0
    %vm249 = vcmp.ge.f32.partialorder %v183, 0.0
    %vm250 = vcmp.ge.f32.partialorder %v188, 0.0
    %vm251 = vcmp.ge.f32.partialorder %v193, 0.0
    %vm252 = vcmp.ge.f32.partialorder %v198, 0.0
    %vm253 = vcmp.ge.f32.partialorder %v203, 0.0
    %vm254 = vcmp.ge.f32.partialorder %v208, 0.0
    %vm255 = vcmp.ge.f32.partialorder %v213, 0.0
    %vm256 = vcmp.ge.f32.partialorder %v218, 0.0
    %vm257 = vcmp.ge.f32.partialorder %v223, 0.0
    %vm258 = vcmp.ge.f32.partialorder %v228, 0.0
    %vm259 = vcmp.ge.f32.partialorder %v233, 0.0
    %vm260 = vcmp.ge.f32.partialorder %v238, 0.0
    %vm261 = vcmp.ge.f32.partialorder %v243, 0.0
    %v262 = vmul.f32 %v168, 0.01
    %v263 = vmul.f32 %v173, 0.01
    %v264 = vmul.f32 %v178, 0.01
    %v265 = vmul.f32 %v183, 0.01
    %v266 = vmul.f32 %v188, 0.01
    %v267 = vmul.f32 %v193, 0.01
    %v268 = vmul.f32 %v198, 0.01
    %v269 = vmul.f32 %v203, 0.01
    %v270 = vmul.f32 %v208, 0.01
    %v271 = vmul.f32 %v213, 0.01
    %v272 = vmul.f32 %v218, 0.01
    %v273 = vmul.f32 %v223, 0.01
    %v274 = vmul.f32 %v228, 0.01
    %v275 = vmul.f32 %v233, 0.01
    %v276 = vmul.f32 %v238, 0.01
    %v277 = vmul.f32 %v243, 0.01
    %v278 = vsel %vm246, %v168, %v262
    %v279 = vsel %vm247, %v173, %v263
    %v280 = vsel %vm248, %v178, %v264
    %v281 = vsel %vm249, %v183, %v265
    %v282 = vsel %vm250, %v188, %v266
    %v283 = vsel %vm251, %v193, %v267
    %v284 = vsel %vm252, %v198, %v268
    %v285 = vsel %vm253, %v203, %v269
    %v286 = vsel %vm254, %v208, %v270
    %v287 = vsel %vm255, %v213, %v271
    %v288 = vsel %vm256, %v218, %v272
    %v289 = vsel %vm257, %v223, %v273
    %v290 = vsel %vm258, %v228, %v274
    %v291 = vsel %vm259, %v233, %v275
    %v292 = vsel %vm260, %v238, %v276
    %v293 = vsel %vm261, %v243, %v277
    %v294 = vld [vmem:[#allocation7] sm:$0xff]
    %v295 = vld [vmem:[#allocation7 + $0x8] sm:$0xff]
    %v296 = vld [vmem:[#allocation7 + $0x10] sm:$0xff]
    %v297 = vld [vmem:[#allocation7 + $0x18] sm:$0xff]
    %v298 = vld [vmem:[#allocation7 + $0x20] sm:$0xff]
    %v299 = vld [vmem:[#allocation7 + $0x28] sm:$0xff]
    %v300 = vld [vmem:[#allocation7 + $0x30] sm:$0xff]
    %v301 = vld [vmem:[#allocation7 + $0x38] sm:$0xff]
    %v302 = vld [vmem:[#allocation7 + $0x40] sm:$0xff]
    %v303 = vld [vmem:[#allocation7 + $0x48] sm:$0xff]
    %v304 = vld [vmem:[#allocation7 + $0x50] sm:$0xff]
    %v305 = vld [vmem:[#allocation7 + $0x58] sm:$0xff]
    %v306 = vld [vmem:[#allocation7 + $0x60] sm:$0xff]
    %v307 = vld [vmem:[#allocation7 + $0x68] sm:$0xff]
    %v308 = vld [vmem:[#allocation7 + $0x70] sm:$0xff]
    %v309 = vld [vmem:[#allocation7 + $0x78] sm:$0xff]
    %v310 = vld [vmem:[%s4] sm:$0x1]
    %v312 = vlaneseq
    %v313 = vshrl.u32 %v312, 7
    %v314 = vsub.s32 0, %v313
    %v315 = vrot.slane %v310, %v314
    %317 = vmatprep.subr.mxu0 0.0
    %318 = vmatpush1.msra.mxu0 %v294
    %319 = vmatprep.subr.mxu0 0.0
    %320 = vmatpush1.msra.mxu0 %v295
    %321 = vmatprep.subr.mxu0 0.0
    %322 = vmatpush1.msra.mxu0 %v296
    %323 = vmatprep.subr.mxu0 0.0
    %324 = vmatpush1.msra.mxu0 %v297
    %325 = vmatprep.subr.mxu0 0.0
    %326 = vmatpush1.msra.mxu0 %v298
    %327 = vmatprep.subr.mxu0 0.0
    %328 = vmatpush1.msra.mxu0 %v299
    %329 = vmatprep.subr.mxu0 0.0
    %330 = vmatpush1.msra.mxu0 %v300
    %331 = vmatprep.subr.mxu0 0.0
    %332 = vmatpush1.msra.mxu0 %v301
    %333 = vmatprep.subr.mxu0 0.0
    %334 = vmatpush1.msra.mxu0 %v302
    %335 = vmatprep.subr.mxu0 0.0
    %336 = vmatpush1.msra.mxu0 %v303
    %337 = vmatprep.subr.mxu0 0.0
    %338 = vmatpush1.msra.mxu0 %v304
    %339 = vmatprep.subr.mxu0 0.0
    %340 = vmatpush1.msra.mxu0 %v305
    %341 = vmatprep.subr.mxu0 0.0
    %342 = vmatpush1.msra.mxu0 %v306
    %343 = vmatprep.subr.mxu0 0.0
    %344 = vmatpush1.msra.mxu0 %v307
    %345 = vmatprep.subr.mxu0 0.0
    %346 = vmatpush1.msra.mxu0 %v308
    %347 = vmatprep.subr.mxu0 0.0
    %348 = vmatpush1.msra.mxu0 %v309
    %349 = vmatprep.subr.mxu0 0.0
    %350 = vmatpush1.msra.mxu0 0.0
    %351 = vmatprep.subr.mxu0 0.0
    %352 = vmatpush1.msra.mxu0 0.0
    %353 = vmatprep.subr.mxu0 0.0
    %354 = vmatpush1.msra.mxu0 0.0
    %355 = vmatprep.subr.mxu0 0.0
    %356 = vmatpush1.msra.mxu0 0.0
    %357 = vmatprep.subr.mxu0 0.0
    %358 = vmatpush1.msra.mxu0 0.0
    %359 = vmatprep.subr.mxu0 0.0
    %360 = vmatpush1.msra.mxu0 0.0
    %361 = vmatprep.subr.mxu0 0.0
    %362 = vmatpush1.msra.mxu0 0.0
    %363 = vmatprep.subr.mxu0 0.0
    %364 = vmatpush1.msra.mxu0 0.0
    %365 = vmatprep.subr.mxu0 0.0
    %366 = vmatpush1.msra.mxu0 0.0
    %367 = vmatprep.subr.mxu0 0.0
    %368 = vmatpush1.msra.mxu0 0.0
    %369 = vmatprep.subr.mxu0 0.0
    %370 = vmatpush1.msra.mxu0 0.0
    %371 = vmatprep.subr.mxu0 0.0
    %372 = vmatpush1.msra.mxu0 0.0
    %373 = vmatprep.subr.mxu0 0.0
    %374 = vmatpush1.msra.mxu0 0.0
    %375 = vmatprep.subr.mxu0 0.0
    %376 = vmatpush1.msra.mxu0 0.0
    %377 = vmatprep.subr.mxu0 0.0
    %378 = vmatpush1.msra.mxu0 0.0
    %379 = vmatprep.subr.mxu0 0.0
    %380 = vmatpush1.msra.mxu0 0.0
    %381 = vmatprep.mubr.f32.mxu0 0.0
    %382 = vmatmul.mubr.f32.gmra.mrb[0].mxu0 %v278
    %v383 = vpop.f32.mrb[0].mxu0
    %v384 = vadd.f32 %v315, %v383
    %v385 = vpop.f32.mrb[0].mxu0
    %386 = vmatprep.mubr.f32.mxu0 0.0
    %387 = vmatmul.mubr.f32.gmra.mrb[0].mxu0 %v279
    %v388 = vpop.f32.mrb[0].mxu0
    %v389 = vadd.f32 %v315, %v388
    %v390 = vpop.f32.mrb[0].mxu0
    %391 = vmatprep.mubr.f32.mxu0 0.0
    %392 = vmatmul.mubr.f32.gmra.mrb[0].mxu0 %v280
    %v393 = vpop.f32.mrb[0].mxu0
    %v394 = vadd.f32 %v315, %v393
    %v395 = vpop.f32.mrb[0].mxu0
    %396 = vmatprep.mubr.f32.mxu0 0.0
    %397 = vmatmul.mubr.f32.gmra.mrb[0].mxu0 %v281
    %v398 = vpop.f32.mrb[0].mxu0
    %v399 = vadd.f32 %v315, %v398
    %v400 = vpop.f32.mrb[0].mxu0
    %401 = vmatprep.mubr.f32.mxu0 0.0
    %402 = vmatmul.mubr.f32.gmra.mrb[0].mxu0 %v282
    %v403 = vpop.f32.mrb[0].mxu0
    %v404 = vadd.f32 %v315, %v403
    %v405 = vpop.f32.mrb[0].mxu0
    %406 = vmatprep.mubr.f32.mxu0 0.0
    %407 = vmatmul.mubr.f32.gmra.mrb[0].mxu0 %v283
    %v408 = vpop.f32.mrb[0].mxu0
    %v409 = vadd.f32 %v315, %v408
    %v410 = vpop.f32.mrb[0].mxu0
    %411 = vmatprep.mubr.f32.mxu0 0.0
    %412 = vmatmul.mubr.f32.gmra.mrb[0].mxu0 %v284
    %v413 = vpop.f32.mrb[0].mxu0
    %v414 = vadd.f32 %v315, %v413
    %v415 = vpop.f32.mrb[0].mxu0
    %416 = vmatprep.mubr.f32.mxu0 0.0
    %417 = vmatmul.mubr.f32.gmra.mrb[0].mxu0 %v285
    %v418 = vpop.f32.mrb[0].mxu0
    %v419 = vadd.f32 %v315, %v418
    %v420 = vpop.f32.mrb[0].mxu0
    %421 = vmatprep.mubr.f32.mxu0 0.0
    %422 = vmatmul.mubr.f32.gmra.mrb[0].mxu0 %v286
    %v423 = vpop.f32.mrb[0].mxu0
    %v424 = vadd.f32 %v315, %v423
    %v425 = vpop.f32.mrb[0].mxu0
    %426 = vmatprep.mubr.f32.mxu0 0.0
    %427 = vmatmul.mubr.f32.gmra.mrb[0].mxu0 %v287
    %v428 = vpop.f32.mrb[0].mxu0
    %v429 = vadd.f32 %v315, %v428
    %v430 = vpop.f32.mrb[0].mxu0
    %431 = vmatprep.mubr.f32.mxu0 0.0
    %432 = vmatmul.mubr.f32.gmra.mrb[0].mxu0 %v288
    %v433 = vpop.f32.mrb[0].mxu0
    %v434 = vadd.f32 %v315, %v433
    %v435 = vpop.f32.mrb[0].mxu0
    %436 = vmatprep.mubr.f32.mxu0 0.0
    %437 = vmatmul.mubr.f32.gmra.mrb[0].mxu0 %v289
    %v438 = vpop.f32.mrb[0].mxu0
    %v439 = vadd.f32 %v315, %v438
    %v440 = vpop.f32.mrb[0].mxu0
    %441 = vmatprep.mubr.f32.mxu0 0.0
    %442 = vmatmul.mubr.f32.gmra.mrb[0].mxu0 %v290
    %v443 = vpop.f32.mrb[0].mxu0
    %v444 = vadd.f32 %v315, %v443
    %v445 = vpop.f32.mrb[0].mxu0
    %446 = vmatprep.mubr.f32.mxu0 0.0
    %447 = vmatmul.mubr.f32.gmra.mrb[0].mxu0 %v291
    %v448 = vpop.f32.mrb[0].mxu0
    %v449 = vadd.f32 %v315, %v448
    %v450 = vpop.f32.mrb[0].mxu0
    %451 = vmatprep.mubr.f32.mxu0 0.0
    %452 = vmatmul.mubr.f32.gmra.mrb[0].mxu0 %v292
    %v453 = vpop.f32.mrb[0].mxu0
    %v454 = vadd.f32 %v315, %v453
    %v455 = vpop.f32.mrb[0].mxu0
    %456 = vmatprep.mubr.f32.mxu0 0.0
    %457 = vmatmul.mubr.f32.gmra.mrb[0].mxu0 %v293
    %v458 = vpop.f32.mrb[0].mxu0
    %v459 = vadd.f32 %v315, %v458
    %v460 = vpop.f32.mrb[0].mxu0
    %461 = vdwg.mxu0
    %vm462 = vcmp.ge.f32.partialorder %v384, 0.0
    %vm463 = vcmp.ge.f32.partialorder %v389, 0.0
    %vm464 = vcmp.ge.f32.partialorder %v394, 0.0
    %vm465 = vcmp.ge.f32.partialorder %v399, 0.0
    %vm466 = vcmp.ge.f32.partialorder %v404, 0.0
    %vm467 = vcmp.ge.f32.partialorder %v409, 0.0
    %vm468 = vcmp.ge.f32.partialorder %v414, 0.0
    %vm469 = vcmp.ge.f32.partialorder %v419, 0.0
    %vm470 = vcmp.ge.f32.partialorder %v424, 0.0
    %vm471 = vcmp.ge.f32.partialorder %v429, 0.0
    %vm472 = vcmp.ge.f32.partialorder %v434, 0.0
    %vm473 = vcmp.ge.f32.partialorder %v439, 0.0
    %vm474 = vcmp.ge.f32.partialorder %v444, 0.0
    %vm475 = vcmp.ge.f32.partialorder %v449, 0.0
    %vm476 = vcmp.ge.f32.partialorder %v454, 0.0
    %vm477 = vcmp.ge.f32.partialorder %v459, 0.0
    %v478 = vmul.f32 %v384, 0.01
    %v479 = vmul.f32 %v389, 0.01
    %v480 = vmul.f32 %v394, 0.01
    %v481 = vmul.f32 %v399, 0.01
    %v482 = vmul.f32 %v404, 0.01
    %v483 = vmul.f32 %v409, 0.01
    %v484 = vmul.f32 %v414, 0.01
    %v485 = vmul.f32 %v419, 0.01
    %v486 = vmul.f32 %v424, 0.01
    %v487 = vmul.f32 %v429, 0.01
    %v488 = vmul.f32 %v434, 0.01
    %v489 = vmul.f32 %v439, 0.01
    %v490 = vmul.f32 %v444, 0.01
    %v491 = vmul.f32 %v449, 0.01
    %v492 = vmul.f32 %v454, 0.01
    %v493 = vmul.f32 %v459, 0.01
    %v494 = vsel %vm462, %v384, %v478
    %v495 = vsel %vm463, %v389, %v479
    %v496 = vsel %vm464, %v394, %v480
    %v497 = vsel %vm465, %v399, %v481
    %v498 = vsel %vm466, %v404, %v482
    %v499 = vsel %vm467, %v409, %v483
    %v500 = vsel %vm468, %v414, %v484
    %v501 = vsel %vm469, %v419, %v485
    %v502 = vsel %vm470, %v424, %v486
    %v503 = vsel %vm471, %v429, %v487
    %v504 = vsel %vm472, %v434, %v488
    %v505 = vsel %vm473, %v439, %v489
    %v506 = vsel %vm474, %v444, %v490
    %v507 = vsel %vm475, %v449, %v491
    %v508 = vsel %vm476, %v454, %v492
    %v509 = vsel %vm477, %v459, %v493
    %510 = vst [vmem:[#allocation8] sm:$0xff] %v494
    %511 = vst [vmem:[#allocation8 + $0x8] sm:$0xff] %v495
    %512 = vst [vmem:[#allocation8 + $0x10] sm:$0xff] %v496
    %513 = vst [vmem:[#allocation8 + $0x18] sm:$0xff] %v497
    %514 = vst [vmem:[#allocation8 + $0x20] sm:$0xff] %v498
    %515 = vst [vmem:[#allocation8 + $0x28] sm:$0xff] %v499
    %516 = vst [vmem:[#allocation8 + $0x30] sm:$0xff] %v500
    %517 = vst [vmem:[#allocation8 + $0x38] sm:$0xff] %v501
    %518 = vst [vmem:[#allocation8 + $0x40] sm:$0xff] %v502
    %519 = vst [vmem:[#allocation8 + $0x48] sm:$0xff] %v503
    %520 = vst [vmem:[#allocation8 + $0x50] sm:$0xff] %v504
    %521 = vst [vmem:[#allocation8 + $0x58] sm:$0xff] %v505
    %522 = vst [vmem:[#allocation8 + $0x60] sm:$0xff] %v506
    %523 = vst [vmem:[#allocation8 + $0x68] sm:$0xff] %v507
    %524 = vst [vmem:[#allocation8 + $0x70] sm:$0xff] %v508
    %525 = vst [vmem:[#allocation8 + $0x78] sm:$0xff] %v509
    // Predicated region
    $region34: #{tpu_custom_call.1} parent=1 // pred_check
      _
    $region35: #{tpu_custom_call.1} parent=1 // pred_check_branch
      %527 = sbr.rel (0) target = $region37
    $region36: #{tpu_custom_call.1} parent=1 // pred_region
      %s529 = ssub.s32 2048, 2048
      %530 = vsyncadd [#allocation4], %s529
      %s531 = sshll.u32 [#allocation8], 4
      %s532 = int_to_ptr.vmem [resolvable:$true] %s531
      %537 = dma.vmem_to_hbm [thread:$0]  %s532, 2048, %s5, [#allocation4], 128, 128, 8
    $region37: #{tpu_custom_call.1} parent=1 // pred_fallthru
      _
    // Predicated region
    $region38: #{tpu_custom_call.1} parent=1 // pred_check
      _
    $region39: #{tpu_custom_call.1} parent=1 // pred_check_branch
      %539 = sbr.rel (0) target = $region41
    $region40: #{tpu_custom_call.1} parent=1 // pred_region
      %540 = dma.done [#allocation4], 2048
    $region41: #{tpu_custom_call.1} parent=1 // pred_fallthru
      _
    %541 = vsyncpa [#allocation3], 1
    %542 = vsyncpa [#allocation6], 1
    %543 = vsyncpa [#allocation4], 1

</llo_original>
